<compile_context>
chip_gen: v5e
topology: v5e:2x2
jax: 0.10.0
libtpu: 0.0.40
codegen_flags: <defaults>
</compile_context>

<pallas_src>
import jax
import jax.numpy as jnp
from jax.experimental import pallas as pl
from jax.experimental.pallas import tpu as pltpu


def mlp_head_kernel(x_ref, w1_ref, b1_ref, w2_ref, b2_ref, o_ref):
    # ---- first matmul: bf16 operands, f32 accumulation on the MXU ----
    x = x_ref[...].astype(jnp.bfloat16)                       # (TB, K) bf16
    h = jnp.dot(x, w1_ref[...],
                preferred_element_type=jnp.float32)           # (TB, H) f32
    # bias + ReLU in f32 (Dropout == identity in eval mode)
    h = jnp.maximum(h + b1_ref[...], 0.0)
    # ---- second matmul: cast h to bf16, f32 accumulation ----
    out = jnp.dot(h.astype(jnp.bfloat16), w2_ref[...],
                  preferred_element_type=jnp.float32)         # (TB, C_pad) f32
    o_ref[...] = (out + b2_ref[...]).astype(o_ref.dtype)


def _round_up(n, m):
    return (n + m - 1) // m * m


def custom_head(x, w1, b1, w2, b2):
    """x: (B, in_features) f32; w1:(K,1024) b1:(1,1024) w2:(1024,C) b2:(1,C).
    Returns (B, C) f32 (eval-mode dropout == identity)."""
    B, K = x.shape
    H = w1.shape[1]
    C = w2.shape[1]

    # Lane-dense output: pad num_classes up to a multiple of 128 (zero cols).
    C_pad = _round_up(C, 128)

    # Batch tile: multiple of 8, capped at 256 (enough to feed the MXU while
    # keeping the activation tiles small and double-bufferable in VMEM).
    if B >= 256:
        TB = 256
    elif B >= 128:
        TB = 128
    else:
        TB = _round_up(B, 8)
    B_pad = _round_up(B, TB)

    # Pad / cast inputs (no-ops when already aligned).
    x_p = x if B_pad == B else jnp.zeros((B_pad, K), x.dtype).at[:B, :].set(x)
    w1_b = w1.astype(jnp.bfloat16)
    if C_pad == C:
        w2_p = w2.astype(jnp.bfloat16)
        b2_p = b2
    else:
        w2_p = jnp.zeros((H, C_pad), jnp.bfloat16).at[:, :C].set(
            w2.astype(jnp.bfloat16))
        b2_p = jnp.zeros((1, C_pad), jnp.float32).at[:, :C].set(b2)

    grid = (B_pad // TB,)
    out = pl.pallas_call(
        mlp_head_kernel,
        out_shape=jax.ShapeDtypeStruct((B_pad, C_pad), jnp.float32),
        grid_spec=pltpu.PrefetchScalarGridSpec(
            num_scalar_prefetch=0,
            grid=grid,
            in_specs=[
                pl.BlockSpec((TB, K), lambda i: (i, 0)),      # x: tiled over batch
                pl.BlockSpec((K, H), lambda i: (0, 0)),       # w1: VMEM-resident
                pl.BlockSpec((1, H), lambda i: (0, 0)),       # b1: VMEM-resident
                pl.BlockSpec((H, C_pad), lambda i: (0, 0)),   # w2: VMEM-resident
                pl.BlockSpec((1, C_pad), lambda i: (0, 0)),   # b2: VMEM-resident
            ],
            out_specs=pl.BlockSpec((TB, C_pad), lambda i: (i, 0)),
        ),
        compiler_params=pltpu.CompilerParams(
            dimension_semantics=("parallel",),  # 2-TC sharding on v7x; no-op elsewhere
        ),
    )(x_p, w1_b, b1, w2_p, b2_p)
    return out[:B, :C]


def init_params(key, in_features, hidden, num_classes):
    """Deterministic init mimicking nn.Linear default U(-1/sqrt(fan_in), +1/sqrt(fan_in))."""
    k1, k2, k3, k4 = jax.random.split(key, 4)
    bound1 = 1.0 / jnp.sqrt(in_features)
    bound2 = 1.0 / jnp.sqrt(hidden)
    w1 = jax.random.uniform(k1, (in_features, hidden), jnp.float32, -bound1, bound1)
    b1 = jax.random.uniform(k2, (1, hidden), jnp.float32, -bound1, bound1)
    w2 = jax.random.uniform(k3, (hidden, num_classes), jnp.float32, -bound2, bound2)
    b2 = jax.random.uniform(k4, (1, num_classes), jnp.float32, -bound2, bound2)
    return w1, b1, w2, b2


if __name__ == "__main__":
    B = 8
    IN_FEATURES = 32
    HIDDEN = 1024
    NUM_CLASSES = 100

    key = jax.random.PRNGKey(0)
    kx, kp = jax.random.split(key)
    x = jax.random.normal(kx, (B, IN_FEATURES), jnp.float32)
    w1, b1, w2, b2 = init_params(kp, IN_FEATURES, HIDDEN, NUM_CLASSES)

    out = custom_head(x, w1, b1, w2, b2)
    out = jax.block_until_ready(out)

    # Reference in plain JAX (eval-mode dropout == identity; f32 weights).
    # bf16 matmul operands in the kernel -> loosened tolerance.
    ref = jnp.maximum(x @ w1 + b1, 0.0) @ w2 + b2
    assert out.shape == (B, NUM_CLASSES), out.shape
    assert jnp.allclose(out, ref, atol=3e-2, rtol=3e-2)

    print("KERNEL_OK")
</pallas_src>

<mosaic_0001>
module attributes {stable_mosaic.version = 11 : i64} {
  func.func @mlp_head_kernel(%arg0: i32, %arg1: memref<8x32xf32, #tpu.memory_space<vmem>>, %arg2: memref<32x1024xbf16, #tpu.memory_space<vmem>>, %arg3: memref<1x1024xf32, #tpu.memory_space<vmem>>, %arg4: memref<1024x128xbf16, #tpu.memory_space<vmem>>, %arg5: memref<1x128xf32, #tpu.memory_space<vmem>>, %arg6: memref<8x128xf32, #tpu.memory_space<vmem>>) attributes {dimension_semantics = [#tpu.dimension_semantics<parallel>], iteration_bounds = array<i64: 1>, scalar_prefetch = 0 : i64, scratch_operands = 0 : i64, tpu.core_type = #tpu.core_type<tc>, window_params = [{transform_indices = @transform_0, window_bounds = array<i64: 8, 32>}, {pipeline_mode = #tpu.pipeline_mode<synchronous>, transform_indices = @transform_1, window_bounds = array<i64: 32, 1024>}, {pipeline_mode = #tpu.pipeline_mode<synchronous>, transform_indices = @transform_2, window_bounds = array<i64: 1, 1024>}, {pipeline_mode = #tpu.pipeline_mode<synchronous>, transform_indices = @transform_3, window_bounds = array<i64: 1024, 128>}, {pipeline_mode = #tpu.pipeline_mode<synchronous>, transform_indices = @transform_4, window_bounds = array<i64: 1, 128>}, {transform_indices = @transform_5, window_bounds = array<i64: 8, 128>}]} {
    %c0 = arith.constant 0 : index
    %c0_0 = arith.constant 0 : index
    %0 = vector.load %arg1[%c0, %c0_0] : memref<8x32xf32, #tpu.memory_space<vmem>>, vector<8x32xf32>
    %1 = arith.truncf %0 : vector<8x32xf32> to vector<8x32xbf16>
    %c0_1 = arith.constant 0 : index
    %c0_2 = arith.constant 0 : index
    %2 = vector.load %arg2[%c0_1, %c0_2] : memref<32x1024xbf16, #tpu.memory_space<vmem>>, vector<32x1024xbf16>
    %cst = arith.constant dense<0.000000e+00> : vector<8x1024xf32>
    %3 = tpu.matmul %1, %2, %cst {dimension_numbers = #tpu.dot_dimension_numbers<[1], [0], [0], [1], [0, 0, 1, 1], [], []>} : vector<8x32xbf16>, vector<32x1024xbf16>, vector<8x1024xf32> -> vector<8x1024xf32>
    %c0_3 = arith.constant 0 : index
    %c0_4 = arith.constant 0 : index
    %4 = vector.load %arg3[%c0_3, %c0_4] : memref<1x1024xf32, #tpu.memory_space<vmem>>, vector<1x1024xf32>
    %5 = vector.broadcast %4 : vector<1x1024xf32> to vector<8x1024xf32>
    %6 = arith.addf %3, %5 : vector<8x1024xf32>
    %cst_5 = arith.constant 0.000000e+00 : f32
    %7 = vector.broadcast %cst_5 : f32 to vector<8x1024xf32>
    %8 = arith.maximumf %6, %7 : vector<8x1024xf32>
    %9 = arith.truncf %8 : vector<8x1024xf32> to vector<8x1024xbf16>
    %c0_6 = arith.constant 0 : index
    %c0_7 = arith.constant 0 : index
    %10 = vector.load %arg4[%c0_6, %c0_7] : memref<1024x128xbf16, #tpu.memory_space<vmem>>, vector<1024x128xbf16>
    %cst_8 = arith.constant dense<0.000000e+00> : vector<8x128xf32>
    %11 = tpu.matmul %9, %10, %cst_8 {dimension_numbers = #tpu.dot_dimension_numbers<[1], [0], [0], [1], [0, 0, 1, 1], [], []>} : vector<8x1024xbf16>, vector<1024x128xbf16>, vector<8x128xf32> -> vector<8x128xf32>
    %c0_9 = arith.constant 0 : index
    %c0_10 = arith.constant 0 : index
    %12 = vector.load %arg5[%c0_9, %c0_10] : memref<1x128xf32, #tpu.memory_space<vmem>>, vector<1x128xf32>
    %13 = vector.broadcast %12 : vector<1x128xf32> to vector<8x128xf32>
    %14 = arith.addf %11, %13 : vector<8x128xf32>
    %c0_11 = arith.constant 0 : index
    %c0_12 = arith.constant 0 : index
    %15 = vector.load %arg6[%c0_11, %c0_12] : memref<8x128xf32, #tpu.memory_space<vmem>>, vector<8x128xf32>
    tpu.vector_store %arg6[%c0_11, %c0_12], %14 {strides = array<i32>} : memref<8x128xf32, #tpu.memory_space<vmem>>, vector<8x128xf32>,
    return
  }
  func.func @transform_0(%arg0: i32) -> (i32, i32) {
    %c0_i32 = arith.constant 0 : i32
    %c0_i32_0 = arith.constant 0 : i32
    return %arg0, %c0_i32 : i32, i32
  }
  func.func @transform_1(%arg0: i32) -> (i32, i32) {
    %c0_i32 = arith.constant 0 : i32
    %c0_i32_0 = arith.constant 0 : i32
    %c0_i32_1 = arith.constant 0 : i32
    return %c0_i32, %c0_i32_0 : i32, i32
  }
  func.func @transform_2(%arg0: i32) -> (i32, i32) {
    %c0_i32 = arith.constant 0 : i32
    %c0_i32_0 = arith.constant 0 : i32
    %c0_i32_1 = arith.constant 0 : i32
    return %c0_i32, %c0_i32_0 : i32, i32
  }
  func.func @transform_3(%arg0: i32) -> (i32, i32) {
    %c0_i32 = arith.constant 0 : i32
    %c0_i32_0 = arith.constant 0 : i32
    %c0_i32_1 = arith.constant 0 : i32
    return %c0_i32, %c0_i32_0 : i32, i32
  }
  func.func @transform_4(%arg0: i32) -> (i32, i32) {
    %c0_i32 = arith.constant 0 : i32
    %c0_i32_0 = arith.constant 0 : i32
    %c0_i32_1 = arith.constant 0 : i32
    return %c0_i32, %c0_i32_0 : i32, i32
  }
  func.func @transform_5(%arg0: i32) -> (i32, i32) {
    %c0_i32 = arith.constant 0 : i32
    %c0_i32_0 = arith.constant 0 : i32
    return %arg0, %c0_i32 : i32, i32
  }
}

</mosaic_0001>

<llo_original>
// kernel: tpu_custom_call.1
$region0: #{tpu_custom_call.1}
  #allocation0 [shape = 'u32[]', space=smem, size = 0x4, offset = 0x4, fixed_abs, tag = 'smem constant byte address 0x4 - core index']
  #allocation1 [shape = 'u32[72,128]{1,0:T(1,128)}', space=vmem, size = 0x9000, scoped, tag = 'internal scratch']
  %s0 = inlined_call_operand.hbm [shape: f32[8,32], index: 0, kind: input, shape index: {}]
  %s1 = inlined_call_operand.hbm [shape: bf16[32,1024], index: 1, kind: input, shape index: {}]
  %s2 = inlined_call_operand.hbm [shape: f32[1,1024], index: 2, kind: input, shape index: {}]
  %s3 = inlined_call_operand.hbm [shape: bf16[1024,128], index: 3, kind: input, shape index: {}]
  %s4 = inlined_call_operand.vmem [shape: f32[1,128], index: 4, kind: input, shape index: {}]
  %s5 = inlined_call_operand.hbm [shape: f32[8,128], index: 5, kind: output, shape index: {}]
  %s6 = sld [smem:[#allocation0]]
  $region46: #{tpu_custom_call.1} parent=0
    _
  %s8 = ssub.s32 1, %s6
  %s9 = scalar_select 0, %s8, %s6
  $region1: #{tpu_custom_call.1} parent=0
    #allocation2 [shape = 'u8[4096]{0}', space=vmem, size = 0x1000, scoped, tag = 'input window, operand 0, single buffered']
    #allocation3 [shape = 's32[1]{0}', space=sflag, size = 0x4, scoped, tag = 'scoped memory for tpu_custom_call.1']
    #allocation4 [shape = 's32[1]{0}', space=sflag, size = 0x4, scoped, tag = 'scoped memory for tpu_custom_call.1']
    #allocation5 [shape = 'u8[65536]{0}', space=vmem, size = 0x10000, scoped, tag = 'input window, operand 1, single buffered']
    #allocation6 [shape = 's32[1]{0}', space=sflag, size = 0x4, scoped, tag = 'scoped memory for tpu_custom_call.1']
    #allocation7 [shape = 'u8[4096]{0}', space=vmem, size = 0x1000, scoped, tag = 'input window, operand 2, single buffered']
    #allocation8 [shape = 'u8[262144]{0}', space=vmem, size = 0x40000, scoped, tag = 'input window, operand 3, single buffered']
    #allocation9 [shape = 's32[1]{0}', space=sflag, size = 0x4, scoped, tag = 'scoped memory for tpu_custom_call.1']
    #allocation10 [shape = 'u8[4096]{0}', space=vmem, size = 0x1000, scoped, tag = 'output window, operand 0, single buffered']
    %10 = vsyncpa [#allocation3], 0
    %11 = vsyncpa [#allocation6], 0
    %12 = vsyncpa [#allocation9], 0
    %13 = vsyncpa [#allocation4], 0
    // Predicated region
    $region2: #{tpu_custom_call.1} parent=1 // pred_check
      _
    $region3: #{tpu_custom_call.1} parent=1 // pred_check_branch
      %15 = sbr.rel (0) target = $region5
    $region4: #{tpu_custom_call.1} parent=1 // pred_region
      %17 = vsyncadd [#allocation3], 0
      %s19 = sshll.u32 %s0, 4
      %s20 = int_to_ptr.hbm [resolvable:$true] %s19
      %s21 = sshll.u32 [#allocation2], 4
      %s22 = int_to_ptr.vmem [resolvable:$true] %s21
      %24 = dma.hbm_to_vmem [thread:$0]  %s20, 128, %s22, [#allocation3]
    $region5: #{tpu_custom_call.1} parent=1 // pred_fallthru
      _
    // Predicated region
    $region6: #{tpu_custom_call.1} parent=1 // pred_check
      _
    $region7: #{tpu_custom_call.1} parent=1 // pred_check_branch
      %26 = sbr.rel (0) target = $region9
    $region8: #{tpu_custom_call.1} parent=1 // pred_region
      %28 = vsyncadd [#allocation6], 0
      %s29 = sshll.u32 %s1, 4
      %s30 = int_to_ptr.hbm [resolvable:$true] %s29
      %s31 = sshll.u32 [#allocation5], 4
      %s32 = int_to_ptr.vmem [resolvable:$true] %s31
      %37 = dma.hbm_to_vmem [thread:$0]  %s30, 2048, %s32, [#allocation6], 512, 512, 32
    $region9: #{tpu_custom_call.1} parent=1 // pred_fallthru
      _
    // Predicated region
    $region10: #{tpu_custom_call.1} parent=1 // pred_check
      _
    $region11: #{tpu_custom_call.1} parent=1 // pred_check_branch
      %39 = sbr.rel (0) target = $region13
    $region12: #{tpu_custom_call.1} parent=1 // pred_region
      %41 = vsyncadd [#allocation6], 0
      %s43 = sshll.u32 %s2, 4
      %s44 = int_to_ptr.hbm [resolvable:$true] %s43
      %s45 = sshll.u32 [#allocation7], 4
      %s46 = int_to_ptr.vmem [resolvable:$true] %s45
      %48 = dma.hbm_to_vmem [thread:$0]  %s44, 128, %s46, [#allocation6]
    $region13: #{tpu_custom_call.1} parent=1 // pred_fallthru
      _
    // Predicated region
    $region14: #{tpu_custom_call.1} parent=1 // pred_check
      _
    $region15: #{tpu_custom_call.1} parent=1 // pred_check_branch
      %50 = sbr.rel (0) target = $region17
    $region16: #{tpu_custom_call.1} parent=1 // pred_region
      %52 = vsyncadd [#allocation9], 0
      %s53 = sshll.u32 %s3, 4
      %s54 = int_to_ptr.hbm [resolvable:$true] %s53
      %s55 = sshll.u32 [#allocation8], 4
      %s56 = int_to_ptr.vmem [resolvable:$true] %s55
      %61 = dma.hbm_to_vmem [thread:$0]  %s54, 8192, %s56, [#allocation9], 64, 64, 4
    $region17: #{tpu_custom_call.1} parent=1 // pred_fallthru
      _
    // Predicated region
    $region18: #{tpu_custom_call.1} parent=1 // pred_check
      _
    $region19: #{tpu_custom_call.1} parent=1 // pred_check_branch
      %63 = sbr.rel (0) target = $region21
    $region20: #{tpu_custom_call.1} parent=1 // pred_region
      _
    $region21: #{tpu_custom_call.1} parent=1 // pred_fallthru
      _
    // Predicated region
    $region22: #{tpu_custom_call.1} parent=1 // pred_check
      _
    $region23: #{tpu_custom_call.1} parent=1 // pred_check_branch
      %65 = sbr.rel (0) target = $region25
    $region24: #{tpu_custom_call.1} parent=1 // pred_region
      %67 = dma.done [#allocation3], 128
    $region25: #{tpu_custom_call.1} parent=1 // pred_fallthru
      _
    // Predicated region
    $region26: #{tpu_custom_call.1} parent=1 // pred_check
      _
    $region27: #{tpu_custom_call.1} parent=1 // pred_check_branch
      %69 = sbr.rel (0) target = $region29
    $region28: #{tpu_custom_call.1} parent=1 // pred_region
      %71 = dma.done [#allocation6], 2048
    $region29: #{tpu_custom_call.1} parent=1 // pred_fallthru
      _
    // Predicated region
    $region30: #{tpu_custom_call.1} parent=1 // pred_check
      _
    $region31: #{tpu_custom_call.1} parent=1 // pred_check_branch
      %73 = sbr.rel (0) target = $region33
    $region32: #{tpu_custom_call.1} parent=1 // pred_region
      %75 = dma.done [#allocation6], 128
    $region33: #{tpu_custom_call.1} parent=1 // pred_fallthru
      _
    // Predicated region
    $region34: #{tpu_custom_call.1} parent=1 // pred_check
      _
    $region35: #{tpu_custom_call.1} parent=1 // pred_check_branch
      %77 = sbr.rel (0) target = $region37
    $region36: #{tpu_custom_call.1} parent=1 // pred_region
      %79 = dma.done [#allocation9], 8192
    $region37: #{tpu_custom_call.1} parent=1 // pred_fallthru
      _
    %v81 = vld [vmem:[#allocation2] sm:$0xff]
    %v82 = vpack.c.bf16 %v81, %v81
    %v83 = vld [vmem:[#allocation5] sm:$0xff]
    %v84 = vld [vmem:[#allocation5 + $0x8] sm:$0xff]
    %v85 = vld [vmem:[#allocation5 + $0x10] sm:$0xff]
    %v86 = vld [vmem:[#allocation5 + $0x18] sm:$0xff]
    %v87 = vld [vmem:[#allocation5 + $0x20] sm:$0xff]
    %v88 = vld [vmem:[#allocation5 + $0x28] sm:$0xff]
    %v89 = vld [vmem:[#allocation5 + $0x30] sm:$0xff]
    %v90 = vld [vmem:[#allocation5 + $0x38] sm:$0xff]
    %v91 = vld [vmem:[#allocation5 + $0x40] sm:$0xff]
    %v92 = vld [vmem:[#allocation5 + $0x48] sm:$0xff]
    %v93 = vld [vmem:[#allocation5 + $0x50] sm:$0xff]
    %v94 = vld [vmem:[#allocation5 + $0x58] sm:$0xff]
    %v95 = vld [vmem:[#allocation5 + $0x60] sm:$0xff]
    %v96 = vld [vmem:[#allocation5 + $0x68] sm:$0xff]
    %v97 = vld [vmem:[#allocation5 + $0x70] sm:$0xff]
    %v98 = vld [vmem:[#allocation5 + $0x78] sm:$0xff]
    %v99 = vld [vmem:[#allocation7] sm:$0xff]
    %v101 = vperm.slane %v99, 0
    %v102 = vperm.slane %v99, 1
    %v103 = vperm.slane %v99, 2
    %v104 = vperm.slane %v99, 3
    %v105 = vperm.slane %v99, 4
    %v106 = vperm.slane %v99, 5
    %v107 = vperm.slane %v99, 6
    %v108 = vperm.slane %v99, 7
    %v133 = vunpack.c.l.b16 %v83
    %v134 = vunpack.c.h.b16 %v83
    %v135 = vunpack.c.l.b16 %v84
    %v136 = vunpack.c.h.b16 %v84
    %v137 = vunpack.c.l.b16 %v85
    %v138 = vunpack.c.h.b16 %v85
    %v139 = vunpack.c.l.b16 %v86
    %v140 = vunpack.c.h.b16 %v86
    %v141 = vunpack.c.l.b16 %v87
    %v142 = vunpack.c.h.b16 %v87
    %v143 = vunpack.c.l.b16 %v88
    %v144 = vunpack.c.h.b16 %v88
    %v145 = vunpack.c.l.b16 %v89
    %v146 = vunpack.c.h.b16 %v89
    %v147 = vunpack.c.l.b16 %v90
    %v148 = vunpack.c.h.b16 %v90
    %v149 = vunpack.c.l.b16 %v91
    %v150 = vunpack.c.h.b16 %v91
    %v151 = vunpack.c.l.b16 %v92
    %v152 = vunpack.c.h.b16 %v92
    %v153 = vunpack.c.l.b16 %v93
    %v154 = vunpack.c.h.b16 %v93
    %v155 = vunpack.c.l.b16 %v94
    %v156 = vunpack.c.h.b16 %v94
    %v157 = vunpack.c.l.b16 %v95
    %v158 = vunpack.c.h.b16 %v95
    %v159 = vunpack.c.l.b16 %v96
    %v160 = vunpack.c.h.b16 %v96
    %v161 = vunpack.c.l.b16 %v97
    %v162 = vunpack.c.h.b16 %v97
    %v163 = vunpack.c.l.b16 %v98
    %v164 = vunpack.c.h.b16 %v98
    %v165 = vpack.c.b16 %v141, %v133
    %v166 = vpack.c.b16 %v142, %v134
    %v167 = vpack.c.b16 %v143, %v135
    %v168 = vpack.c.b16 %v144, %v136
    %v169 = vpack.c.b16 %v145, %v137
    %v170 = vpack.c.b16 %v146, %v138
    %v171 = vpack.c.b16 %v147, %v139
    %v172 = vpack.c.b16 %v148, %v140
    %v173 = vpack.c.b16 %v157, %v149
    %v174 = vpack.c.b16 %v158, %v150
    %v175 = vpack.c.b16 %v159, %v151
    %v176 = vpack.c.b16 %v160, %v152
    %v177 = vpack.c.b16 %v161, %v153
    %v178 = vpack.c.b16 %v162, %v154
    %v179 = vpack.c.b16 %v163, %v155
    %v180 = vpack.c.b16 %v164, %v156
    %vm197 = vcmask 261120
    %v199 = vsel %vm197, %v82, 0
    %201 = vmatpush.bf16.msra.mxu0 0
    %202 = vmatpush.bf16.msra.mxu0 0
    %203 = vmatpush.bf16.msra.mxu0 0
    %204 = vmatpush.bf16.msra.mxu0 0
    %205 = vmatpush.bf16.msra.mxu0 0
    %206 = vmatpush.bf16.msra.mxu0 0
    %207 = vmatpush.bf16.msra.mxu0 %v173
    %208 = vmatpush.bf16.msra.mxu0 %v165
    %209 = vmatmul.bf16.gmra.mxu0 %v199
    %v210 = vpop.f32.mrf.mxu0
    %v211 = vadd.f32 %v101, %v210
    %v212 = vpop.f32.mrf.mxu0
    %213 = vdwg.mxu0
    %214 = vmatpush.bf16.msra.mxu0 0
    %215 = vmatpush.bf16.msra.mxu0 0
    %216 = vmatpush.bf16.msra.mxu0 0
    %217 = vmatpush.bf16.msra.mxu0 0
    %218 = vmatpush.bf16.msra.mxu0 0
    %219 = vmatpush.bf16.msra.mxu0 0
    %220 = vmatpush.bf16.msra.mxu0 %v174
    %221 = vmatpush.bf16.msra.mxu0 %v166
    %222 = vmatmul.bf16.gmra.mxu0 %v199
    %v223 = vpop.f32.mrf.mxu0
    %v224 = vadd.f32 %v102, %v223
    %v225 = vpop.f32.mrf.mxu0
    %226 = vdwg.mxu0
    %227 = vmatpush.bf16.msra.mxu0 0
    %228 = vmatpush.bf16.msra.mxu0 0
    %229 = vmatpush.bf16.msra.mxu0 0
    %230 = vmatpush.bf16.msra.mxu0 0
    %231 = vmatpush.bf16.msra.mxu0 0
    %232 = vmatpush.bf16.msra.mxu0 0
    %233 = vmatpush.bf16.msra.mxu0 %v175
    %234 = vmatpush.bf16.msra.mxu0 %v167
    %235 = vmatmul.bf16.gmra.mxu0 %v199
    %v236 = vpop.f32.mrf.mxu0
    %v237 = vadd.f32 %v103, %v236
    %v238 = vpop.f32.mrf.mxu0
    %239 = vdwg.mxu0
    %240 = vmatpush.bf16.msra.mxu0 0
    %241 = vmatpush.bf16.msra.mxu0 0
    %242 = vmatpush.bf16.msra.mxu0 0
    %243 = vmatpush.bf16.msra.mxu0 0
    %244 = vmatpush.bf16.msra.mxu0 0
    %245 = vmatpush.bf16.msra.mxu0 0
    %246 = vmatpush.bf16.msra.mxu0 %v176
    %247 = vmatpush.bf16.msra.mxu0 %v168
    %248 = vmatmul.bf16.gmra.mxu0 %v199
    %v249 = vpop.f32.mrf.mxu0
    %v250 = vadd.f32 %v104, %v249
    %v251 = vpop.f32.mrf.mxu0
    %252 = vdwg.mxu0
    %253 = vmatpush.bf16.msra.mxu0 0
    %254 = vmatpush.bf16.msra.mxu0 0
    %255 = vmatpush.bf16.msra.mxu0 0
    %256 = vmatpush.bf16.msra.mxu0 0
    %257 = vmatpush.bf16.msra.mxu0 0
    %258 = vmatpush.bf16.msra.mxu0 0
    %259 = vmatpush.bf16.msra.mxu0 %v177
    %260 = vmatpush.bf16.msra.mxu0 %v169
    %261 = vmatmul.bf16.gmra.mxu0 %v199
    %v262 = vpop.f32.mrf.mxu0
    %v263 = vadd.f32 %v105, %v262
    %v264 = vpop.f32.mrf.mxu0
    %265 = vdwg.mxu0
    %266 = vmatpush.bf16.msra.mxu0 0
    %267 = vmatpush.bf16.msra.mxu0 0
    %268 = vmatpush.bf16.msra.mxu0 0
    %269 = vmatpush.bf16.msra.mxu0 0
    %270 = vmatpush.bf16.msra.mxu0 0
    %271 = vmatpush.bf16.msra.mxu0 0
    %272 = vmatpush.bf16.msra.mxu0 %v178
    %273 = vmatpush.bf16.msra.mxu0 %v170
    %274 = vmatmul.bf16.gmra.mxu0 %v199
    %v275 = vpop.f32.mrf.mxu0
    %v276 = vadd.f32 %v106, %v275
    %v277 = vpop.f32.mrf.mxu0
    %278 = vdwg.mxu0
    %279 = vmatpush.bf16.msra.mxu0 0
    %280 = vmatpush.bf16.msra.mxu0 0
    %281 = vmatpush.bf16.msra.mxu0 0
    %282 = vmatpush.bf16.msra.mxu0 0
    %283 = vmatpush.bf16.msra.mxu0 0
    %284 = vmatpush.bf16.msra.mxu0 0
    %285 = vmatpush.bf16.msra.mxu0 %v179
    %286 = vmatpush.bf16.msra.mxu0 %v171
    %287 = vmatmul.bf16.gmra.mxu0 %v199
    %v288 = vpop.f32.mrf.mxu0
    %v289 = vadd.f32 %v107, %v288
    %v290 = vpop.f32.mrf.mxu0
    %291 = vdwg.mxu0
    %292 = vmatpush.bf16.msra.mxu0 0
    %293 = vmatpush.bf16.msra.mxu0 0
    %294 = vmatpush.bf16.msra.mxu0 0
    %295 = vmatpush.bf16.msra.mxu0 0
    %296 = vmatpush.bf16.msra.mxu0 0
    %297 = vmatpush.bf16.msra.mxu0 0
    %298 = vmatpush.bf16.msra.mxu0 %v180
    %299 = vmatpush.bf16.msra.mxu0 %v172
    %300 = vmatmul.bf16.gmra.mxu0 %v199
    %v301 = vpop.f32.mrf.mxu0
    %v302 = vadd.f32 %v108, %v301
    %v303 = vpop.f32.mrf.mxu0
    %304 = vdwg.mxu0
    %v305 = vmax.f32 %v211, 0.0
    %v306 = vmax.f32 %v224, 0.0
    %v307 = vmax.f32 %v237, 0.0
    %v308 = vmax.f32 %v250, 0.0
    %v309 = vmax.f32 %v263, 0.0
    %v310 = vmax.f32 %v276, 0.0
    %v311 = vmax.f32 %v289, 0.0
    %v312 = vmax.f32 %v302, 0.0
    %v313 = vpack.c.bf16 %v305, %v305
    %v314 = vpack.c.bf16 %v306, %v306
    %v315 = vpack.c.bf16 %v307, %v307
    %v316 = vpack.c.bf16 %v308, %v308
    %v317 = vpack.c.bf16 %v309, %v309
    %v318 = vpack.c.bf16 %v310, %v310
    %v319 = vpack.c.bf16 %v311, %v311
    %v320 = vpack.c.bf16 %v312, %v312
    %v321 = vld [vmem:[#allocation8] sm:$0xf]
    %v322 = vld [vmem:[#allocation8 + $0x4] sm:$0xf]
    %v323 = vld [vmem:[#allocation8 + $0x8] sm:$0xf]
    %v324 = vld [vmem:[#allocation8 + $0xc] sm:$0xf]
    %v325 = vld [vmem:[#allocation8 + $0x10] sm:$0xf]
    %v326 = vld [vmem:[#allocation8 + $0x14] sm:$0xf]
    %v327 = vld [vmem:[#allocation8 + $0x18] sm:$0xf]
    %v328 = vld [vmem:[#allocation8 + $0x1c] sm:$0xf]
    %v329 = vld [vmem:[#allocation8 + $0x20] sm:$0xf]
    %v330 = vld [vmem:[#allocation8 + $0x24] sm:$0xf]
    %v331 = vld [vmem:[#allocation8 + $0x28] sm:$0xf]
    %v332 = vld [vmem:[#allocation8 + $0x2c] sm:$0xf]
    %v333 = vld [vmem:[#allocation8 + $0x30] sm:$0xf]
    %v334 = vld [vmem:[#allocation8 + $0x34] sm:$0xf]
    %v335 = vld [vmem:[#allocation8 + $0x38] sm:$0xf]
    %v336 = vld [vmem:[#allocation8 + $0x3c] sm:$0xf]
    %v337 = vld [vmem:[#allocation8 + $0x40] sm:$0xf]
    %v338 = vld [vmem:[#allocation8 + $0x44] sm:$0xf]
    %v339 = vld [vmem:[#allocation8 + $0x48] sm:$0xf]
    %v340 = vld [vmem:[#allocation8 + $0x4c] sm:$0xf]
    %v341 = vld [vmem:[#allocation8 + $0x50] sm:$0xf]
    %v342 = vld [vmem:[#allocation8 + $0x54] sm:$0xf]
    %v343 = vld [vmem:[#allocation8 + $0x58] sm:$0xf]
    %v344 = vld [vmem:[#allocation8 + $0x5c] sm:$0xf]
    %v345 = vld [vmem:[#allocation8 + $0x60] sm:$0xf]
    %v346 = vld [vmem:[#allocation8 + $0x64] sm:$0xf]
    %v347 = vld [vmem:[#allocation8 + $0x68] sm:$0xf]
    %v348 = vld [vmem:[#allocation8 + $0x6c] sm:$0xf]
    %v349 = vld [vmem:[#allocation8 + $0x70] sm:$0xf]
    %v350 = vld [vmem:[#allocation8 + $0x74] sm:$0xf]
    %v351 = vld [vmem:[#allocation8 + $0x78] sm:$0xf]
    %v352 = vld [vmem:[#allocation8 + $0x7c] sm:$0xf]
    %v353 = vld [vmem:[#allocation8 + $0x80] sm:$0xf]
    %v354 = vld [vmem:[#allocation8 + $0x84] sm:$0xf]
    %v355 = vld [vmem:[#allocation8 + $0x88] sm:$0xf]
    %v356 = vld [vmem:[#allocation8 + $0x8c] sm:$0xf]
    %v357 = vld [vmem:[#allocation8 + $0x90] sm:$0xf]
    %v358 = vld [vmem:[#allocation8 + $0x94] sm:$0xf]
    %v359 = vld [vmem:[#allocation8 + $0x98] sm:$0xf]
    %v360 = vld [vmem:[#allocation8 + $0x9c] sm:$0xf]
    %v361 = vld [vmem:[#allocation8 + $0xa0] sm:$0xf]
    %v362 = vld [vmem:[#allocation8 + $0xa4] sm:$0xf]
    %v363 = vld [vmem:[#allocation8 + $0xa8] sm:$0xf]
    %v364 = vld [vmem:[#allocation8 + $0xac] sm:$0xf]
    %v365 = vld [vmem:[#allocation8 + $0xb0] sm:$0xf]
    %v366 = vld [vmem:[#allocation8 + $0xb4] sm:$0xf]
    %v367 = vld [vmem:[#allocation8 + $0xb8] sm:$0xf]
    %v368 = vld [vmem:[#allocation8 + $0xbc] sm:$0xf]
    %v369 = vld [vmem:[#allocation8 + $0xc0] sm:$0xf]
    %v370 = vld [vmem:[#allocation8 + $0xc4] sm:$0xf]
    %v371 = vld [vmem:[#allocation8 + $0xc8] sm:$0xf]
    %v372 = vld [vmem:[#allocation8 + $0xcc] sm:$0xf]
    %v373 = vld [vmem:[#allocation8 + $0xd0] sm:$0xf]
    %v374 = vld [vmem:[#allocation8 + $0xd4] sm:$0xf]
    %v375 = vld [vmem:[#allocation8 + $0xd8] sm:$0xf]
    %v376 = vld [vmem:[#allocation8 + $0xdc] sm:$0xf]
    %v377 = vld [vmem:[#allocation8 + $0xe0] sm:$0xf]
    %v378 = vld [vmem:[#allocation8 + $0xe4] sm:$0xf]
    %v379 = vld [vmem:[#allocation8 + $0xe8] sm:$0xf]
    %v380 = vld [vmem:[#allocation8 + $0xec] sm:$0xf]
    %v381 = vld [vmem:[#allocation8 + $0xf0] sm:$0xf]
    %v382 = vld [vmem:[#allocation8 + $0xf4] sm:$0xf]
    %v383 = vld [vmem:[#allocation8 + $0xf8] sm:$0xf]
    %v384 = vld [vmem:[#allocation8 + $0xfc] sm:$0xf]
    %v385 = vld [vmem:[#allocation8 + $0x100] sm:$0xf]
    %v386 = vld [vmem:[#allocation8 + $0x104] sm:$0xf]
    %v387 = vld [vmem:[#allocation8 + $0x108] sm:$0xf]
    %v388 = vld [vmem:[#allocation8 + $0x10c] sm:$0xf]
    %v389 = vld [vmem:[#allocation8 + $0x110] sm:$0xf]
    %v390 = vld [vmem:[#allocation8 + $0x114] sm:$0xf]
    %v391 = vld [vmem:[#allocation8 + $0x118] sm:$0xf]
    %v392 = vld [vmem:[#allocation8 + $0x11c] sm:$0xf]
    %v393 = vld [vmem:[#allocation8 + $0x120] sm:$0xf]
    %v394 = vld [vmem:[#allocation8 + $0x124] sm:$0xf]
    %v395 = vld [vmem:[#allocation8 + $0x128] sm:$0xf]
    %v396 = vld [vmem:[#allocation8 + $0x12c] sm:$0xf]
    %v397 = vld [vmem:[#allocation8 + $0x130] sm:$0xf]
    %v398 = vld [vmem:[#allocation8 + $0x134] sm:$0xf]
    %v399 = vld [vmem:[#allocation8 + $0x138] sm:$0xf]
    %v400 = vld [vmem:[#allocation8 + $0x13c] sm:$0xf]
    %v401 = vld [vmem:[#allocation8 + $0x140] sm:$0xf]
    %v402 = vld [vmem:[#allocation8 + $0x144] sm:$0xf]
    %v403 = vld [vmem:[#allocation8 + $0x148] sm:$0xf]
    %v404 = vld [vmem:[#allocation8 + $0x14c] sm:$0xf]
    %v405 = vld [vmem:[#allocation8 + $0x150] sm:$0xf]
    %v406 = vld [vmem:[#allocation8 + $0x154] sm:$0xf]
    %v407 = vld [vmem:[#allocation8 + $0x158] sm:$0xf]
    %v408 = vld [vmem:[#allocation8 + $0x15c] sm:$0xf]
    %v409 = vld [vmem:[#allocation8 + $0x160] sm:$0xf]
    %v410 = vld [vmem:[#allocation8 + $0x164] sm:$0xf]
    %v411 = vld [vmem:[#allocation8 + $0x168] sm:$0xf]
    %v412 = vld [vmem:[#allocation8 + $0x16c] sm:$0xf]
    %v413 = vld [vmem:[#allocation8 + $0x170] sm:$0xf]
    %v414 = vld [vmem:[#allocation8 + $0x174] sm:$0xf]
    %v415 = vld [vmem:[#allocation8 + $0x178] sm:$0xf]
    %v416 = vld [vmem:[#allocation8 + $0x17c] sm:$0xf]
    %v417 = vld [vmem:[#allocation8 + $0x180] sm:$0xf]
    %v418 = vld [vmem:[#allocation8 + $0x184] sm:$0xf]
    %v419 = vld [vmem:[#allocation8 + $0x188] sm:$0xf]
    %v420 = vld [vmem:[#allocation8 + $0x18c] sm:$0xf]
    %v421 = vld [vmem:[#allocation8 + $0x190] sm:$0xf]
    %v422 = vld [vmem:[#allocation8 + $0x194] sm:$0xf]
    %v423 = vld [vmem:[#allocation8 + $0x198] sm:$0xf]
    %v424 = vld [vmem:[#allocation8 + $0x19c] sm:$0xf]
    %v425 = vld [vmem:[#allocation8 + $0x1a0] sm:$0xf]
    %v426 = vld [vmem:[#allocation8 + $0x1a4] sm:$0xf]
    %v427 = vld [vmem:[#allocation8 + $0x1a8] sm:$0xf]
    %v428 = vld [vmem:[#allocation8 + $0x1ac] sm:$0xf]
    %v429 = vld [vmem:[#allocation8 + $0x1b0] sm:$0xf]
    %v430 = vld [vmem:[#allocation8 + $0x1b4] sm:$0xf]
    %v431 = vld [vmem:[#allocation8 + $0x1b8] sm:$0xf]
    %v432 = vld [vmem:[#allocation8 + $0x1bc] sm:$0xf]
    %v433 = vld [vmem:[#allocation8 + $0x1c0] sm:$0xf]
    %v434 = vld [vmem:[#allocation8 + $0x1c4] sm:$0xf]
    %v435 = vld [vmem:[#allocation8 + $0x1c8] sm:$0xf]
    %v436 = vld [vmem:[#allocation8 + $0x1cc] sm:$0xf]
    %v437 = vld [vmem:[#allocation8 + $0x1d0] sm:$0xf]
    %v438 = vld [vmem:[#allocation8 + $0x1d4] sm:$0xf]
    %v439 = vld [vmem:[#allocation8 + $0x1d8] sm:$0xf]
    %v440 = vld [vmem:[#allocation8 + $0x1dc] sm:$0xf]
    %v441 = vld [vmem:[#allocation8 + $0x1e0] sm:$0xf]
    %v442 = vld [vmem:[#allocation8 + $0x1e4] sm:$0xf]
    %v443 = vld [vmem:[#allocation8 + $0x1e8] sm:$0xf]
    %v444 = vld [vmem:[#allocation8 + $0x1ec] sm:$0xf]
    %v445 = vld [vmem:[#allocation8 + $0x1f0] sm:$0xf]
    %v446 = vld [vmem:[#allocation8 + $0x1f4] sm:$0xf]
    %v447 = vld [vmem:[#allocation8 + $0x1f8] sm:$0xf]
    %v448 = vld [vmem:[#allocation8 + $0x1fc] sm:$0xf]
    %v449 = vld [vmem:[%s4] sm:$0x1]
    %v451 = vperm.slane %v449, 0
    %v581 = vunpack.c.l.b16 %v321
    %v582 = vunpack.c.l.b16 %v322
    %v583 = vunpack.c.l.b16 %v323
    %v584 = vunpack.c.l.b16 %v324
    %v585 = vunpack.c.l.b16 %v325
    %v586 = vunpack.c.l.b16 %v326
    %v587 = vunpack.c.l.b16 %v327
    %v588 = vunpack.c.l.b16 %v328
    %v589 = vunpack.c.l.b16 %v329
    %v590 = vunpack.c.l.b16 %v330
    %v591 = vunpack.c.l.b16 %v331
    %v592 = vunpack.c.l.b16 %v332
    %v593 = vunpack.c.l.b16 %v333
    %v594 = vunpack.c.l.b16 %v334
    %v595 = vunpack.c.l.b16 %v335
    %v596 = vunpack.c.l.b16 %v336
    %v597 = vunpack.c.l.b16 %v337
    %v598 = vunpack.c.l.b16 %v338
    %v599 = vunpack.c.l.b16 %v339
    %v600 = vunpack.c.l.b16 %v340
    %v601 = vunpack.c.l.b16 %v341
    %v602 = vunpack.c.l.b16 %v342
    %v603 = vunpack.c.l.b16 %v343
    %v604 = vunpack.c.l.b16 %v344
    %v605 = vunpack.c.l.b16 %v345
    %v606 = vunpack.c.l.b16 %v346
    %v607 = vunpack.c.l.b16 %v347
    %v608 = vunpack.c.l.b16 %v348
    %v609 = vunpack.c.l.b16 %v349
    %v610 = vunpack.c.l.b16 %v350
    %v611 = vunpack.c.l.b16 %v351
    %v612 = vunpack.c.l.b16 %v352
    %v613 = vunpack.c.l.b16 %v353
    %v614 = vunpack.c.l.b16 %v354
    %v615 = vunpack.c.l.b16 %v355
    %v616 = vunpack.c.l.b16 %v356
    %v617 = vunpack.c.l.b16 %v357
    %v618 = vunpack.c.l.b16 %v358
    %v619 = vunpack.c.l.b16 %v359
    %v620 = vunpack.c.l.b16 %v360
    %v621 = vunpack.c.l.b16 %v361
    %v622 = vunpack.c.l.b16 %v362
    %v623 = vunpack.c.l.b16 %v363
    %v624 = vunpack.c.l.b16 %v364
    %v625 = vunpack.c.l.b16 %v365
    %v626 = vunpack.c.l.b16 %v366
    %v627 = vunpack.c.l.b16 %v367
    %v628 = vunpack.c.l.b16 %v368
    %v629 = vunpack.c.l.b16 %v369
    %v630 = vunpack.c.l.b16 %v370
    %v631 = vunpack.c.l.b16 %v371
    %v632 = vunpack.c.l.b16 %v372
    %v633 = vunpack.c.l.b16 %v373
    %v634 = vunpack.c.l.b16 %v374
    %v635 = vunpack.c.l.b16 %v375
    %v636 = vunpack.c.l.b16 %v376
    %v637 = vunpack.c.l.b16 %v377
    %v638 = vunpack.c.l.b16 %v378
    %v639 = vunpack.c.l.b16 %v379
    %v640 = vunpack.c.l.b16 %v380
    %v641 = vunpack.c.l.b16 %v381
    %v642 = vunpack.c.l.b16 %v382
    %v643 = vunpack.c.l.b16 %v383
    %v644 = vunpack.c.l.b16 %v384
    %v645 = vunpack.c.l.b16 %v385
    %v646 = vunpack.c.l.b16 %v386
    %v647 = vunpack.c.l.b16 %v387
    %v648 = vunpack.c.l.b16 %v388
    %v649 = vunpack.c.l.b16 %v389
    %v650 = vunpack.c.l.b16 %v390
    %v651 = vunpack.c.l.b16 %v391
    %v652 = vunpack.c.l.b16 %v392
    %v653 = vunpack.c.l.b16 %v393
    %v654 = vunpack.c.l.b16 %v394
    %v655 = vunpack.c.l.b16 %v395
    %v656 = vunpack.c.l.b16 %v396
    %v657 = vunpack.c.l.b16 %v397
    %v658 = vunpack.c.l.b16 %v398
    %v659 = vunpack.c.l.b16 %v399
    %v660 = vunpack.c.l.b16 %v400
    %v661 = vunpack.c.l.b16 %v401
    %v662 = vunpack.c.l.b16 %v402
    %v663 = vunpack.c.l.b16 %v403
    %v664 = vunpack.c.l.b16 %v404
    %v665 = vunpack.c.l.b16 %v405
    %v666 = vunpack.c.l.b16 %v406
    %v667 = vunpack.c.l.b16 %v407
    %v668 = vunpack.c.l.b16 %v408
    %v669 = vunpack.c.l.b16 %v409
    %v670 = vunpack.c.l.b16 %v410
    %v671 = vunpack.c.l.b16 %v411
    %v672 = vunpack.c.l.b16 %v412
    %v673 = vunpack.c.l.b16 %v413
    %v674 = vunpack.c.l.b16 %v414
    %v675 = vunpack.c.l.b16 %v415
    %v676 = vunpack.c.l.b16 %v416
    %v677 = vunpack.c.l.b16 %v417
    %v678 = vunpack.c.l.b16 %v418
    %v679 = vunpack.c.l.b16 %v419
    %v680 = vunpack.c.l.b16 %v420
    %v681 = vunpack.c.l.b16 %v421
    %v682 = vunpack.c.l.b16 %v422
    %v683 = vunpack.c.l.b16 %v423
    %v684 = vunpack.c.l.b16 %v424
    %v685 = vunpack.c.l.b16 %v425
    %v686 = vunpack.c.l.b16 %v426
    %v687 = vunpack.c.l.b16 %v427
    %v688 = vunpack.c.l.b16 %v428
    %v689 = vunpack.c.l.b16 %v429
    %v690 = vunpack.c.l.b16 %v430
    %v691 = vunpack.c.l.b16 %v431
    %v692 = vunpack.c.l.b16 %v432
    %v693 = vunpack.c.l.b16 %v433
    %v694 = vunpack.c.l.b16 %v434
    %v695 = vunpack.c.l.b16 %v435
    %v696 = vunpack.c.l.b16 %v436
    %v697 = vunpack.c.l.b16 %v437
    %v698 = vunpack.c.l.b16 %v438
    %v699 = vunpack.c.l.b16 %v439
    %v700 = vunpack.c.l.b16 %v440
    %v701 = vunpack.c.l.b16 %v441
    %v702 = vunpack.c.l.b16 %v442
    %v703 = vunpack.c.l.b16 %v443
    %v704 = vunpack.c.l.b16 %v444
    %v705 = vunpack.c.l.b16 %v445
    %v706 = vunpack.c.l.b16 %v446
    %v707 = vunpack.c.l.b16 %v447
    %v708 = vunpack.c.l.b16 %v448
    %v709 = vpack.c.b16 %v582, %v581
    %v710 = vpack.c.b16 %v584, %v583
    %v711 = vpack.c.b16 %v586, %v585
    %v712 = vpack.c.b16 %v588, %v587
    %v713 = vpack.c.b16 %v590, %v589
    %v714 = vpack.c.b16 %v592, %v591
    %v715 = vpack.c.b16 %v594, %v593
    %v716 = vpack.c.b16 %v596, %v595
    %v717 = vpack.c.b16 %v598, %v597
    %v718 = vpack.c.b16 %v600, %v599
    %v719 = vpack.c.b16 %v602, %v601
    %v720 = vpack.c.b16 %v604, %v603
    %v721 = vpack.c.b16 %v606, %v605
    %v722 = vpack.c.b16 %v608, %v607
    %v723 = vpack.c.b16 %v610, %v609
    %v724 = vpack.c.b16 %v612, %v611
    %v725 = vpack.c.b16 %v614, %v613
    %v726 = vpack.c.b16 %v616, %v615
    %v727 = vpack.c.b16 %v618, %v617
    %v728 = vpack.c.b16 %v620, %v619
    %v729 = vpack.c.b16 %v622, %v621
    %v730 = vpack.c.b16 %v624, %v623
    %v731 = vpack.c.b16 %v626, %v625
    %v732 = vpack.c.b16 %v628, %v627
    %v733 = vpack.c.b16 %v630, %v629
    %v734 = vpack.c.b16 %v632, %v631
    %v735 = vpack.c.b16 %v634, %v633
    %v736 = vpack.c.b16 %v636, %v635
    %v737 = vpack.c.b16 %v638, %v637
    %v738 = vpack.c.b16 %v640, %v639
    %v739 = vpack.c.b16 %v642, %v641
    %v740 = vpack.c.b16 %v644, %v643
    %v741 = vpack.c.b16 %v646, %v645
    %v742 = vpack.c.b16 %v648, %v647
    %v743 = vpack.c.b16 %v650, %v649
    %v744 = vpack.c.b16 %v652, %v651
    %v745 = vpack.c.b16 %v654, %v653
    %v746 = vpack.c.b16 %v656, %v655
    %v747 = vpack.c.b16 %v658, %v657
    %v748 = vpack.c.b16 %v660, %v659
    %v749 = vpack.c.b16 %v662, %v661
    %v750 = vpack.c.b16 %v664, %v663
    %v751 = vpack.c.b16 %v666, %v665
    %v752 = vpack.c.b16 %v668, %v667
    %v753 = vpack.c.b16 %v670, %v669
    %v754 = vpack.c.b16 %v672, %v671
    %v755 = vpack.c.b16 %v674, %v673
    %v756 = vpack.c.b16 %v676, %v675
    %v757 = vpack.c.b16 %v678, %v677
    %v758 = vpack.c.b16 %v680, %v679
    %v759 = vpack.c.b16 %v682, %v681
    %v760 = vpack.c.b16 %v684, %v683
    %v761 = vpack.c.b16 %v686, %v685
    %v762 = vpack.c.b16 %v688, %v687
    %v763 = vpack.c.b16 %v690, %v689
    %v764 = vpack.c.b16 %v692, %v691
    %v765 = vpack.c.b16 %v694, %v693
    %v766 = vpack.c.b16 %v696, %v695
    %v767 = vpack.c.b16 %v698, %v697
    %v768 = vpack.c.b16 %v700, %v699
    %v769 = vpack.c.b16 %v702, %v701
    %v770 = vpack.c.b16 %v704, %v703
    %v771 = vpack.c.b16 %v706, %v705
    %v772 = vpack.c.b16 %v708, %v707
    %837 = vmatpush.bf16.msra.mxu0 %v716
    %838 = vmatpush.bf16.msra.mxu0 %v715
    %839 = vmatpush.bf16.msra.mxu0 %v714
    %840 = vmatpush.bf16.msra.mxu0 %v713
    %841 = vmatpush.bf16.msra.mxu0 %v712
    %842 = vmatpush.bf16.msra.mxu0 %v711
    %843 = vmatpush.bf16.msra.mxu0 %v710
    %844 = vmatpush.bf16.msra.mxu0 %v709
    %845 = vmatmul.bf16.gmra.mxu0 %v313
    %v846 = vpop.f32.mrf.mxu0
    %v847 = vadd.f32 %v451, %v846
    %v848 = vpop.f32.mrf.mxu0
    %849 = vdwg.mxu0
    %850 = vmatpush.bf16.msra.mxu0 %v724
    %851 = vmatpush.bf16.msra.mxu0 %v723
    %852 = vmatpush.bf16.msra.mxu0 %v722
    %853 = vmatpush.bf16.msra.mxu0 %v721
    %854 = vmatpush.bf16.msra.mxu0 %v720
    %855 = vmatpush.bf16.msra.mxu0 %v719
    %856 = vmatpush.bf16.msra.mxu0 %v718
    %857 = vmatpush.bf16.msra.mxu0 %v717
    %858 = vmatmul.bf16.gmra.mxu0 %v314
    %v859 = vpop.f32.mrf.mxu0
    %v860 = vadd.f32 %v847, %v859
    %v861 = vpop.f32.mrf.mxu0
    %862 = vdwg.mxu0
    %863 = vmatpush.bf16.msra.mxu0 %v732
    %864 = vmatpush.bf16.msra.mxu0 %v731
    %865 = vmatpush.bf16.msra.mxu0 %v730
    %866 = vmatpush.bf16.msra.mxu0 %v729
    %867 = vmatpush.bf16.msra.mxu0 %v728
    %868 = vmatpush.bf16.msra.mxu0 %v727
    %869 = vmatpush.bf16.msra.mxu0 %v726
    %870 = vmatpush.bf16.msra.mxu0 %v725
    %871 = vmatmul.bf16.gmra.mxu0 %v315
    %v872 = vpop.f32.mrf.mxu0
    %v873 = vadd.f32 %v860, %v872
    %v874 = vpop.f32.mrf.mxu0
    %875 = vdwg.mxu0
    %876 = vmatpush.bf16.msra.mxu0 %v740
    %877 = vmatpush.bf16.msra.mxu0 %v739
    %878 = vmatpush.bf16.msra.mxu0 %v738
    %879 = vmatpush.bf16.msra.mxu0 %v737
    %880 = vmatpush.bf16.msra.mxu0 %v736
    %881 = vmatpush.bf16.msra.mxu0 %v735
    %882 = vmatpush.bf16.msra.mxu0 %v734
    %883 = vmatpush.bf16.msra.mxu0 %v733
    %884 = vmatmul.bf16.gmra.mxu0 %v316
    %v885 = vpop.f32.mrf.mxu0
    %v886 = vadd.f32 %v873, %v885
    %v887 = vpop.f32.mrf.mxu0
    %888 = vdwg.mxu0
    %889 = vmatpush.bf16.msra.mxu0 %v748
    %890 = vmatpush.bf16.msra.mxu0 %v747
    %891 = vmatpush.bf16.msra.mxu0 %v746
    %892 = vmatpush.bf16.msra.mxu0 %v745
    %893 = vmatpush.bf16.msra.mxu0 %v744
    %894 = vmatpush.bf16.msra.mxu0 %v743
    %895 = vmatpush.bf16.msra.mxu0 %v742
    %896 = vmatpush.bf16.msra.mxu0 %v741
    %897 = vmatmul.bf16.gmra.mxu0 %v317
    %v898 = vpop.f32.mrf.mxu0
    %v899 = vadd.f32 %v886, %v898
    %v900 = vpop.f32.mrf.mxu0
    %901 = vdwg.mxu0
    %902 = vmatpush.bf16.msra.mxu0 %v756
    %903 = vmatpush.bf16.msra.mxu0 %v755
    %904 = vmatpush.bf16.msra.mxu0 %v754
    %905 = vmatpush.bf16.msra.mxu0 %v753
    %906 = vmatpush.bf16.msra.mxu0 %v752
    %907 = vmatpush.bf16.msra.mxu0 %v751
    %908 = vmatpush.bf16.msra.mxu0 %v750
    %909 = vmatpush.bf16.msra.mxu0 %v749
    %910 = vmatmul.bf16.gmra.mxu0 %v318
    %v911 = vpop.f32.mrf.mxu0
    %v912 = vadd.f32 %v899, %v911
    %v913 = vpop.f32.mrf.mxu0
    %914 = vdwg.mxu0
    %915 = vmatpush.bf16.msra.mxu0 %v764
    %916 = vmatpush.bf16.msra.mxu0 %v763
    %917 = vmatpush.bf16.msra.mxu0 %v762
    %918 = vmatpush.bf16.msra.mxu0 %v761
    %919 = vmatpush.bf16.msra.mxu0 %v760
    %920 = vmatpush.bf16.msra.mxu0 %v759
    %921 = vmatpush.bf16.msra.mxu0 %v758
    %922 = vmatpush.bf16.msra.mxu0 %v757
    %923 = vmatmul.bf16.gmra.mxu0 %v319
    %v924 = vpop.f32.mrf.mxu0
    %v925 = vadd.f32 %v912, %v924
    %v926 = vpop.f32.mrf.mxu0
    %927 = vdwg.mxu0
    %928 = vmatpush.bf16.msra.mxu0 %v772
    %929 = vmatpush.bf16.msra.mxu0 %v771
    %930 = vmatpush.bf16.msra.mxu0 %v770
    %931 = vmatpush.bf16.msra.mxu0 %v769
    %932 = vmatpush.bf16.msra.mxu0 %v768
    %933 = vmatpush.bf16.msra.mxu0 %v767
    %934 = vmatpush.bf16.msra.mxu0 %v766
    %935 = vmatpush.bf16.msra.mxu0 %v765
    %936 = vmatmul.bf16.gmra.mxu0 %v320
    %v937 = vpop.f32.mrf.mxu0
    %v938 = vadd.f32 %v925, %v937
    %v939 = vpop.f32.mrf.mxu0
    %940 = vdwg.mxu0
    %941 = vst [vmem:[#allocation10] sm:$0xff] %v938
    // Predicated region
    $region38: #{tpu_custom_call.1} parent=1 // pred_check
      _
    $region39: #{tpu_custom_call.1} parent=1 // pred_check_branch
      %943 = sbr.rel (0) target = $region41
    $region40: #{tpu_custom_call.1} parent=1 // pred_region
      %945 = vsyncadd [#allocation4], 0
      %s947 = sshll.u32 [#allocation10], 4
      %s948 = int_to_ptr.vmem [resolvable:$true] %s947
      %s949 = sshll.u32 %s5, 4
      %s950 = int_to_ptr.hbm [resolvable:$true] %s949
      %952 = dma.vmem_to_hbm [thread:$0]  %s948, 128, %s950, [#allocation4]
    $region41: #{tpu_custom_call.1} parent=1 // pred_fallthru
      _
    // Predicated region
    $region42: #{tpu_custom_call.1} parent=1 // pred_check
      _
    $region43: #{tpu_custom_call.1} parent=1 // pred_check_branch
      %954 = sbr.rel (0) target = $region45
    $region44: #{tpu_custom_call.1} parent=1 // pred_region
      %956 = dma.done [#allocation4], 128
    $region45: #{tpu_custom_call.1} parent=1 // pred_fallthru
      _
    %957 = vsyncpa [#allocation3], 1
    %958 = vsyncpa [#allocation6], 1
    %959 = vsyncpa [#allocation9], 1
    %960 = vsyncpa [#allocation4], 1

</llo_original>
